<compile_context>
chip_gen: v6e
topology: v6e:2x2x1
jax: 0.10.0
libtpu: 0.0.40
codegen_flags: <defaults>
</compile_context>

<pallas_src>
import math

import jax
import jax.numpy as jnp
from jax.experimental import pallas as pl
from jax.experimental.pallas import tpu as pltpu

_SMALL_BYTES = 512 << 10            # single-block cutoff (no grid below this)
_LANE_CANDIDATES = (2048, 1024, 512, 256, 128)


def _copy_kernel(x_ref, o_ref):
    # Reshape moves no data: the kernel is a straight VMEM tile copy.
    o_ref[...] = x_ref[...]


def _chip_generation() -> int:
    """Best-effort TPU generation detection (5 / 6 / 7)."""
    try:
        kind = jax.devices()[0].device_kind.lower()
    except Exception:
        return 5
    if "v7" in kind:
        return 7
    if "v6" in kind:
        return 6
    return 5  # v5e / v5p / older / unknown -> most conservative settings


def _gen_params(gen: int):
    """Return (target_block_bytes, buffer_count, vmem_limit_bytes, dim_semantics)."""
    if gen >= 7:
        # v7x: faster HBM makes per-step overhead relatively larger -> bigger
        # blocks + 3-deep buffering; CORE_PARALLEL shards rows over both TCs.
        # 4 MiB x (in+out) x 3 buffers ~= 24 MiB, within the 32 MiB scope.
        return (4 << 20, 3, 32 << 20, (pltpu.CORE_PARALLEL,))
    if gen == 6:
        # v6e: 4 MiB blocks sit at the top of the measured copy roofline;
        # double-buffered footprint (~16 MiB) fits the 32 MiB default scope.
        return (4 << 20, 2, 32 << 20, ("parallel",))
    # v5e: default scoped VMEM is 16 MiB -> keep the footprint at ~8 MiB.
    return (2 << 20, 2, None, ("parallel",))


def _pallas_copy_2d(x2d: jax.Array) -> jax.Array:
    """Copy a lane-dense 2-D slab through a Pallas kernel (HBM->VMEM->HBM)."""
    rows, cols = (int(d) for d in x2d.shape)
    itemsize = x2d.dtype.itemsize
    nbytes = rows * cols * itemsize
    cost = pl.CostEstimate(flops=0, transcendentals=0, bytes_accessed=2 * nbytes)

    if nbytes <= _SMALL_BYTES:
        # Tiny arrays: a single full-array block; pipelining buys nothing.
        return pl.pallas_call(
            _copy_kernel,
            out_shape=jax.ShapeDtypeStruct((rows, cols), x2d.dtype),
            in_specs=[pl.BlockSpec((rows, cols), lambda: (0, 0))],
            out_specs=pl.BlockSpec((rows, cols), lambda: (0, 0)),
            cost_estimate=cost,
        )(x2d)

    target_bytes, buf_count, vmem_limit, dim_sem = _gen_params(_chip_generation())

    # Sublane packing multiple for this dtype (8 rows f32, 16 bf16, 32 int8).
    sub_mult = 8 * max(1, 4 // itemsize)
    target_tm = max(
        sub_mult,
        (target_bytes // (cols * itemsize)) // sub_mult * sub_mult,
    )
    if target_tm >= rows:
        tm = rows
    else:
        # Prefer the largest tm <= target that divides rows: every block is a
        # fully contiguous HBM slab and there is no masked partial edge block.
        tm = None
        cand = target_tm
        while cand >= sub_mult:
            if rows % cand == 0:
                tm = cand
                break
            cand -= sub_mult
        if tm is None:
            tm = target_tm  # at most one partial edge block; still correct

    grid = (pl.cdiv(rows, tm),)

    # pipeline_mode default is double-buffering; only request deeper buffering
    # when the generation profile asks for it (v7x).
    if buf_count > 2:
        in_spec = pl.BlockSpec((tm, cols), lambda i: (i, 0),
                               pipeline_mode=pl.Buffered(buf_count))
        out_spec = pl.BlockSpec((tm, cols), lambda i: (i, 0),
                                pipeline_mode=pl.Buffered(buf_count))
    else:
        in_spec = pl.BlockSpec((tm, cols), lambda i: (i, 0))
        out_spec = pl.BlockSpec((tm, cols), lambda i: (i, 0))

    return pl.pallas_call(
        _copy_kernel,
        out_shape=jax.ShapeDtypeStruct((rows, cols), x2d.dtype),
        grid=grid,
        in_specs=[in_spec],
        out_specs=out_spec,
        compiler_params=pltpu.CompilerParams(
            dimension_semantics=dim_sem,
            vmem_limit_bytes=vmem_limit,
        ),
        cost_estimate=cost,
    )(x2d)


class Reshape:
    """JAX/Pallas port of the PyTorch Reshape module."""

    def __init__(self, shape, start_dim: int = 1, end_dim: int = -1):
        self.shape = tuple(shape)
        self.start_dim = start_dim
        self.end_dim = end_dim

    def __call__(self, x: jax.Array) -> jax.Array:
        x_shape = tuple(x.shape)
        # Exactly mirror: x.shape[:start_dim] + self.shape + x.shape[end_dim:][1:]
        new_shape = (
            x_shape[: self.start_dim]
            + self.shape
            + x_shape[self.end_dim:][1:]
        )

        total = int(math.prod(x_shape)) if x_shape else 1
        # Zero-size or non-128-multiple element counts never hit the kernel:
        # a (1, total) slab would be 1/8 sublane utilization with masked
        # stores and per-step overhead dominating — pure metadata reshape is
        # both correct and optimal there.
        if total == 0 or total % 128 != 0:
            return jnp.reshape(x, new_shape)

        # Present the data as a lane-dense (rows, cols) slab: cols = largest
        # 128-multiple divisor of `total`, capped at 2048.
        cols = next(c for c in _LANE_CANDIDATES if total % c == 0)
        rows = total // cols

        # These reshapes are metadata-only in XLA; the Pallas kernel carries
        # the actual HBM traffic.
        x2d = jnp.reshape(x, (rows, cols))
        y2d = _pallas_copy_2d(x2d)
        return jnp.reshape(y2d, new_shape)


if __name__ == "__main__":
    key = jax.random.PRNGKey(0)
    key_small, key_mid, key_big = jax.random.split(key, 3)

    # Dreamer/RSSM usage: flatten a conv feature map (NCHW) per batch element.
    B, C, H, W = 2, 4, 16, 16
    x = jax.random.normal(key_small, (B, C, H, W), dtype=jnp.float32)

    # (2, 4, 16, 16) -> (2, 1024)   [small single-block path]
    mod_flat = Reshape(shape=(C * H * W,), start_dim=1, end_dim=-1)
    y_flat = jax.block_until_ready(mod_flat(x))
    ref_flat = jnp.reshape(x, (B, C * H * W))
    assert y_flat.shape == (B, C * H * W), y_flat.shape
    assert y_flat.dtype == x.dtype
    assert bool(jnp.array_equal(y_flat, ref_flat))

    # Reverse direction: (2, 1024) -> (2, 4, 16, 16)
    mod_unflat = Reshape(shape=(C, H, W), start_dim=1, end_dim=-1)
    y_unflat = jax.block_until_ready(mod_unflat(ref_flat))
    assert y_unflat.shape == (B, C, H, W), y_unflat.shape
    assert bool(jnp.array_equal(y_unflat, x))

    # Mid-size input (~1 MiB) now exercises the pipelined tiled path.
    Bm, Cm, Hm, Wm = 8, 32, 32, 32
    x_mid = jax.random.normal(key_mid, (Bm, Cm, Hm, Wm), dtype=jnp.float32)
    mod_mid = Reshape(shape=(Cm * Hm * Wm,), start_dim=1, end_dim=-1)
    y_mid = jax.block_until_ready(mod_mid(x_mid))
    assert y_mid.shape == (Bm, Cm * Hm * Wm), y_mid.shape
    assert bool(jnp.array_equal(y_mid, jnp.reshape(x_mid, (Bm, Cm * Hm * Wm))))

    # Larger input (8 MiB) exercises the full-size tiled 1-D grid.
    B2, C2, H2, W2 = 32, 64, 32, 32
    x_big = jax.random.normal(key_big, (B2, C2, H2, W2), dtype=jnp.float32)
    mod_big = Reshape(shape=(C2 * H2 * W2,), start_dim=1, end_dim=-1)
    y_big = jax.block_until_ready(mod_big(x_big))
    assert y_big.shape == (B2, C2 * H2 * W2), y_big.shape
    assert bool(jnp.array_equal(y_big, jnp.reshape(x_big, (B2, C2 * H2 * W2))))

    # Non-128-multiple element count: bypasses the kernel (metadata reshape).
    x_odd = jax.random.normal(key_small, (2, 3, 5), dtype=jnp.float32)
    y_odd = Reshape(shape=(15,), start_dim=1, end_dim=-1)(x_odd)
    assert y_odd.shape == (2, 15), y_odd.shape
    assert bool(jnp.array_equal(y_odd, jnp.reshape(x_odd, (2, 15))))

    # Zero-size edge case: skips the kernel, metadata reshape only.
    x_zero = jnp.zeros((B, 0, H, W), dtype=jnp.float32)
    y_zero = Reshape(shape=(0,), start_dim=1, end_dim=-1)(x_zero)
    assert y_zero.shape == (B, 0), y_zero.shape

    print("KERNEL_OK")
</pallas_src>

<mosaic_0001>
module attributes {stable_mosaic.version = 11 : i64} {
  func.func @_copy_kernel(%arg0: memref<1x2048xf32, #tpu.memory_space<vmem>>, %arg1: memref<1x2048xf32, #tpu.memory_space<vmem>>) attributes {dimension_semantics = [], scalar_prefetch = 0 : i64, scratch_operands = 0 : i64, tpu.core_type = #tpu.core_type<tc>} {
    %c0 = arith.constant 0 : index
    %c0_0 = arith.constant 0 : index
    %0 = vector.load %arg0[%c0, %c0_0] : memref<1x2048xf32, #tpu.memory_space<vmem>>, vector<1x2048xf32>
    %c0_1 = arith.constant 0 : index
    %c0_2 = arith.constant 0 : index
    %1 = vector.load %arg1[%c0_1, %c0_2] : memref<1x2048xf32, #tpu.memory_space<vmem>>, vector<1x2048xf32>
    tpu.vector_store %arg1[%c0_1, %c0_2], %0 {strides = array<i32>} : memref<1x2048xf32, #tpu.memory_space<vmem>>, vector<1x2048xf32>,
    return
  }
}

</mosaic_0001>

<llo_original>
// kernel: tpu_custom_call.1
$region0: #{tpu_custom_call.1}
  #allocation0 [shape = 'u32[]', space=smem, size = 0x4, offset = 0x4, fixed_abs, tag = 'smem constant byte address 0x4 - core index']
  #allocation1 [shape = 'u32[144,128]{1,0:T(1,128)}', space=vmem, size = 0x12000, scoped, tag = 'internal scratch']
  %s0 = inlined_call_operand.hbm [shape: f32[1,2048], index: 0, kind: input, shape index: {}]
  %s1 = inlined_call_operand.hbm [shape: f32[1,2048], index: 1, kind: output, shape index: {}]
  %s2 = sld [smem:[#allocation0]]
  $region18: #{tpu_custom_call.1} parent=0
    _
  %s4 = ssub.s32 1, %s2
  %s5 = scalar_select 0, %s4, %s2
  $region1: #{tpu_custom_call.1} parent=0
    #allocation2 [shape = 'u8[8192]{0}', space=vmem, size = 0x2000, scoped, tag = 'input window, operand 0, single buffered']
    #allocation3 [shape = 's32[1]{0}', space=sflag, size = 0x4, scoped, tag = 'scoped memory for tpu_custom_call.1']
    #allocation4 [shape = 's32[1]{0}', space=sflag, size = 0x4, scoped, tag = 'scoped memory for tpu_custom_call.1']
    #allocation5 [shape = 'u8[8192]{0}', space=vmem, size = 0x2000, scoped, tag = 'output window, operand 0, single buffered']
    %6 = vsyncpa [#allocation3], 0
    %7 = vsyncpa [#allocation4], 0
    // Predicated region
    $region2: #{tpu_custom_call.1} parent=1 // pred_check
      _
    $region3: #{tpu_custom_call.1} parent=1 // pred_check_branch
      %9 = sbr.rel (0) target = $region5
    $region4: #{tpu_custom_call.1} parent=1 // pred_region
      %s11 = ssub.s32 256, 256
      %12 = vsyncadd [#allocation3], %s11
      %s14 = sshll.u32 [#allocation2], 4
      %s15 = int_to_ptr.vmem [resolvable:$true] %s14
      %17 = dma.hbm_to_vmem [thread:$0]  %s0, 256, %s15, [#allocation3]
    $region5: #{tpu_custom_call.1} parent=1 // pred_fallthru
      _
    // Predicated region
    $region6: #{tpu_custom_call.1} parent=1 // pred_check
      _
    $region7: #{tpu_custom_call.1} parent=1 // pred_check_branch
      %19 = sbr.rel (0) target = $region9
    $region8: #{tpu_custom_call.1} parent=1 // pred_region
      %20 = dma.done [#allocation3], 256
    $region9: #{tpu_custom_call.1} parent=1 // pred_fallthru
      _
    %v21 = vld [vmem:[#allocation2] sm:$0xff]
    %v22 = vld [vmem:[#allocation2 + $0x8] sm:$0xff]
    %23 = vst [vmem:[#allocation5] sm:$0xff] %v21
    %24 = vst [vmem:[#allocation5 + $0x8] sm:$0xff] %v22
    // Predicated region
    $region10: #{tpu_custom_call.1} parent=1 // pred_check
      _
    $region11: #{tpu_custom_call.1} parent=1 // pred_check_branch
      %26 = sbr.rel (0) target = $region13
    $region12: #{tpu_custom_call.1} parent=1 // pred_region
      %s28 = ssub.s32 256, 256
      %29 = vsyncadd [#allocation4], %s28
      %s31 = sshll.u32 [#allocation5], 4
      %s32 = int_to_ptr.vmem [resolvable:$true] %s31
      %34 = dma.vmem_to_hbm [thread:$0]  %s32, 256, %s1, [#allocation4]
    $region13: #{tpu_custom_call.1} parent=1 // pred_fallthru
      _
    // Predicated region
    $region14: #{tpu_custom_call.1} parent=1 // pred_check
      _
    $region15: #{tpu_custom_call.1} parent=1 // pred_check_branch
      %36 = sbr.rel (0) target = $region17
    $region16: #{tpu_custom_call.1} parent=1 // pred_region
      %37 = dma.done [#allocation4], 256
    $region17: #{tpu_custom_call.1} parent=1 // pred_fallthru
      _
    %38 = vsyncpa [#allocation3], 1
    %39 = vsyncpa [#allocation4], 1

</llo_original>
